<compile_context>
chip_gen: v5e
topology: v5e:2x2
jax: 0.10.0
libtpu: 0.0.40
codegen_flags: <defaults>
</compile_context>

<pallas_src>
import functools
import math

import jax
import jax.numpy as jnp
from jax.experimental import pallas as pl
from jax.experimental.pallas import tpu as pltpu


def _dgcn_kernel(x_ref, aq_ref, ah_ref, theta_ref, bias_ref, out_ref, *, orders):
    """One batch element per grid step (diffusion recurrence + fused projection).

    x_ref:     (N, T)        float32   x_ref[n, t] = X[b, n, t]
    aq_ref:    (N, N)        bfloat16  forward random-walk support (resident)
    ah_ref:    (N, N)        bfloat16  backward random-walk support (resident)
    theta_ref: (M, T, C_pad) float32   theta[m, t, :] = Theta1[t*M + m, :] (cols zero-padded)
    bias_ref:  (1, C_pad)    float32   (zero-padded)
    out_ref:   (N, C_pad)    float32   lane-dense single store
    """

    def mxu(a, b):
        # bf16 MXU inputs, f32 accumulate.
        return jnp.dot(a.astype(jnp.bfloat16), b.astype(jnp.bfloat16),
                       preferred_element_type=jnp.float32)

    x0 = x_ref[...]                                  # (N, T) f32 carry

    # m = 0 term seeds the accumulator -> no zeros init needed.
    acc = mxu(x0, theta_ref[0])                      # (N, C_pad) f32

    # Diffusion (Chebyshev-like) recurrence with the Theta projection fused.
    # NOTE: x0/x1 deliberately carry over from the first support's inner loop
    # into the second support's recurrence -- faithful to the PyTorch module
    # (this is NOT an independent Chebyshev basis per support).
    m = 1
    for support_ref in (aq_ref, ah_ref):
        support = support_ref[...]                   # (N, N) bf16, resident
        x1 = mxu(support, x0)                        # f32
        acc = acc + mxu(x1, theta_ref[m])
        m += 1
        for _k in range(2, orders + 1):
            x2 = 2.0 * mxu(support, x1) - x0         # recurrence stays f32
            acc = acc + mxu(x2, theta_ref[m])
            m += 1
            x1, x0 = x2, x1

    # Single lane-dense store: f32 bias add + relu fused.
    out_ref[...] = jnp.maximum(acc + bias_ref[...], 0.0)


def _d_gcn_forward_impl(X, A_q, A_h, Theta1, bias, *, orders):
    """X: (B, N, T); A_q/A_h: (N, N); Theta1: (T*M, C_out); bias: (C_out,)."""
    B, N, T = X.shape
    M = 2 * orders + 1
    C_out = Theta1.shape[1]
    assert Theta1.shape[0] == T * M

    # ---- prologue / parameter repack (constant per parameter set; XLA
    # constant-folds it under jit; a real model does this once at load time).
    LANES = 128
    C_pad = ((C_out + LANES - 1) // LANES) * LANES
    # PyTorch flattens the (T, M) index row-major (t*M + m); repack per-matrix
    # and zero-pad the output channels to a full 128-lane width.
    theta_r = jnp.transpose(Theta1.reshape(T, M, C_out), (1, 0, 2))     # (M, T, C)
    theta_r = jnp.pad(theta_r, ((0, 0), (0, 0), (0, C_pad - C_out)))
    theta_r = theta_r.astype(jnp.float32)
    bias2d = jnp.pad(bias, (0, C_pad - C_out)).reshape(1, C_pad).astype(jnp.float32)
    aq_b = A_q.astype(jnp.bfloat16)   # bf16 supports: half the DMA bytes / VMEM
    ah_b = A_h.astype(jnp.bfloat16)
    x_f32 = X.astype(jnp.float32)

    kernel = functools.partial(_dgcn_kernel, orders=orders)

    flops = B * (2 * orders * 2 * N * N * T + M * 2 * N * T * C_pad)
    bytes_accessed = (x_f32.size * 4 + aq_b.size * 2 + ah_b.size * 2
                      + theta_r.size * 4 + bias2d.size * 4 + B * N * C_pad * 4)

    out = pl.pallas_call(
        kernel,
        out_shape=jax.ShapeDtypeStruct((B, N, C_pad), jnp.float32),
        grid=(B,),
        in_specs=[
            # streamed per-batch activation block (double-buffered by Pallas)
            pl.BlockSpec((None, N, T), lambda b: (b, 0, 0)),
            # supports / Theta / bias: constant index_map -> resident in VMEM
            pl.BlockSpec((N, N), lambda b: (0, 0)),
            pl.BlockSpec((N, N), lambda b: (0, 0)),
            pl.BlockSpec((M, T, C_pad), lambda b: (0, 0, 0)),
            pl.BlockSpec((1, C_pad), lambda b: (0, 0)),
        ],
        out_specs=pl.BlockSpec((None, N, C_pad), lambda b: (b, 0, 0)),
        compiler_params=pltpu.CompilerParams(
            # Batch axis shards across v7x's two TensorCores; harmless on
            # single-TC v5e / v6e.
            dimension_semantics=("parallel",),
            # Working set (supports + Theta + a few double-buffered blocks) is
            # tiny; keep the cap well inside v7x's 64 MiB physical VMEM.
            vmem_limit_bytes=32 * 1024 * 1024,
        ),
        cost_estimate=pl.CostEstimate(flops=flops, transcendentals=0,
                                      bytes_accessed=bytes_accessed),
    )(x_f32, aq_b, ah_b, theta_r, bias2d)

    return out[:, :, :C_out]


d_gcn_forward = jax.jit(_d_gcn_forward_impl, static_argnames=("orders",))


def d_gcn_reference(X, A_q, A_h, Theta1, bias, *, orders, mxu_dtype=jnp.bfloat16):
    """Direct jnp transcription of the PyTorch forward.  `mxu_dtype` mirrors
    the kernel's bf16-at-MXU-inputs / f32-accumulate policy (pass jnp.float32
    for the exact f32 reference)."""
    B, N, T = X.shape
    M = 2 * orders + 1

    def mm(a, b):
        return jnp.dot(a.astype(mxu_dtype), b.astype(mxu_dtype),
                       preferred_element_type=jnp.float32)

    x0 = jnp.transpose(X, (1, 2, 0)).reshape(N, T * B)
    xs = [x0]
    for support in (A_q, A_h):
        x1 = mm(support, x0)
        xs.append(x1)
        for _k in range(2, orders + 1):
            x2 = 2.0 * mm(support, x1) - x0
            xs.append(x2)
            x1, x0 = x2, x1
    x = jnp.stack(xs, axis=0).reshape(M, N, T, B)
    x = jnp.transpose(x, (3, 1, 2, 0)).reshape(B, N, T * M)
    x = mm(x, Theta1) + bias
    return jnp.maximum(x, 0.0)


if __name__ == "__main__":
    # in_channels (= num time steps) = 8, out_channels = 32, orders = 2
    # -> num_matrices = 5; batch = 2; num_nodes = 16.
    B, N, T, C_OUT, ORDERS = 2, 16, 8, 32, 2
    M = 2 * ORDERS + 1

    key = jax.random.PRNGKey(0)
    kx, kq, kh, kth, kb = jax.random.split(key, 5)

    X = jax.random.normal(kx, (B, N, T), dtype=jnp.float32)

    # Deterministic "random walk" supports: row-normalized non-negative.
    aq_raw = jax.random.uniform(kq, (N, N), dtype=jnp.float32)
    ah_raw = jax.random.uniform(kh, (N, N), dtype=jnp.float32)
    A_q = aq_raw / jnp.sum(aq_raw, axis=1, keepdims=True)
    A_h = ah_raw / jnp.sum(ah_raw, axis=1, keepdims=True)

    # Parameter init mirroring reset_parameters(): uniform(-stdv, stdv).
    stdv = 1.0 / math.sqrt(C_OUT)
    Theta1 = jax.random.uniform(kth, (T * M, C_OUT), dtype=jnp.float32,
                                minval=-stdv, maxval=stdv)
    stdv1 = 1.0 / math.sqrt(C_OUT)
    bias = jax.random.uniform(kb, (C_OUT,), dtype=jnp.float32,
                              minval=-stdv1, maxval=stdv1)

    out = d_gcn_forward(X, A_q, A_h, Theta1, bias, orders=ORDERS)
    out = jax.block_until_ready(out)
    assert out.shape == (B, N, C_OUT)

    # Verify against a numerics-matched jnp transcription of the PyTorch
    # forward (same bf16 MXU inputs / f32 accumulation as the kernel).
    ref = d_gcn_reference(X, A_q, A_h, Theta1, bias, orders=ORDERS)
    assert jnp.allclose(out, ref, atol=1e-4, rtol=1e-4), "mismatch vs reference"

    print("KERNEL_OK")
</pallas_src>

<mosaic_0001>
module attributes {stable_mosaic.version = 11 : i64} {
  func.func @_dgcn_kernel(%arg0: i32, %arg1: memref<1x16x8xf32, #tpu.memory_space<vmem>>, %arg2: memref<16x16xbf16, #tpu.memory_space<vmem>>, %arg3: memref<16x16xbf16, #tpu.memory_space<vmem>>, %arg4: memref<5x8x128xf32, #tpu.memory_space<vmem>>, %arg5: memref<1x128xf32, #tpu.memory_space<vmem>>, %arg6: memref<1x16x128xf32, #tpu.memory_space<vmem>>) attributes {dimension_semantics = [#tpu.dimension_semantics<parallel>], iteration_bounds = array<i64: 2>, scalar_prefetch = 0 : i64, scratch_operands = 0 : i64, tpu.core_type = #tpu.core_type<tc>, window_params = [{transform_indices = @transform_0, window_bounds = array<i64: 1, 16, 8>}, {pipeline_mode = #tpu.pipeline_mode<synchronous>, transform_indices = @transform_1, window_bounds = array<i64: 16, 16>}, {pipeline_mode = #tpu.pipeline_mode<synchronous>, transform_indices = @transform_2, window_bounds = array<i64: 16, 16>}, {pipeline_mode = #tpu.pipeline_mode<synchronous>, transform_indices = @transform_3, window_bounds = array<i64: 5, 8, 128>}, {pipeline_mode = #tpu.pipeline_mode<synchronous>, transform_indices = @transform_4, window_bounds = array<i64: 1, 128>}, {transform_indices = @transform_5, window_bounds = array<i64: 1, 16, 128>}]} {
    %c0 = arith.constant 0 : index
    %c0_0 = arith.constant 0 : index
    %c0_1 = arith.constant 0 : index
    %0 = vector.load %arg1[%c0, %c0_0, %c0_1] : memref<1x16x8xf32, #tpu.memory_space<vmem>>, vector<1x16x8xf32>
    %1 = vector.shape_cast %0 : vector<1x16x8xf32> to vector<16x8xf32>
    %c0_2 = arith.constant 0 : index
    %c0_3 = arith.constant 0 : index
    %c0_4 = arith.constant 0 : index
    %2 = vector.load %arg4[%c0_2, %c0_3, %c0_4] : memref<5x8x128xf32, #tpu.memory_space<vmem>>, vector<1x8x128xf32>
    %3 = vector.shape_cast %2 : vector<1x8x128xf32> to vector<8x128xf32>
    %4 = arith.truncf %1 : vector<16x8xf32> to vector<16x8xbf16>
    %5 = arith.truncf %3 : vector<8x128xf32> to vector<8x128xbf16>
    %cst = arith.constant dense<0.000000e+00> : vector<16x128xf32>
    %6 = tpu.matmul %4, %5, %cst {dimension_numbers = #tpu.dot_dimension_numbers<[1], [0], [0], [1], [0, 0, 1, 1], [], []>} : vector<16x8xbf16>, vector<8x128xbf16>, vector<16x128xf32> -> vector<16x128xf32>
    %c0_5 = arith.constant 0 : index
    %c0_6 = arith.constant 0 : index
    %7 = vector.load %arg2[%c0_5, %c0_6] : memref<16x16xbf16, #tpu.memory_space<vmem>>, vector<16x16xbf16>
    %8 = arith.truncf %1 : vector<16x8xf32> to vector<16x8xbf16>
    %cst_7 = arith.constant dense<0.000000e+00> : vector<16x8xf32>
    %9 = tpu.matmul %7, %8, %cst_7 {dimension_numbers = #tpu.dot_dimension_numbers<[1], [0], [0], [1], [0, 0, 1, 1], [], []>} : vector<16x16xbf16>, vector<16x8xbf16>, vector<16x8xf32> -> vector<16x8xf32>
    %c1 = arith.constant 1 : index
    %c0_8 = arith.constant 0 : index
    %c0_9 = arith.constant 0 : index
    %10 = vector.load %arg4[%c1, %c0_8, %c0_9] : memref<5x8x128xf32, #tpu.memory_space<vmem>>, vector<1x8x128xf32>
    %11 = vector.shape_cast %10 : vector<1x8x128xf32> to vector<8x128xf32>
    %12 = arith.truncf %9 : vector<16x8xf32> to vector<16x8xbf16>
    %13 = arith.truncf %11 : vector<8x128xf32> to vector<8x128xbf16>
    %cst_10 = arith.constant dense<0.000000e+00> : vector<16x128xf32>
    %14 = tpu.matmul %12, %13, %cst_10 {dimension_numbers = #tpu.dot_dimension_numbers<[1], [0], [0], [1], [0, 0, 1, 1], [], []>} : vector<16x8xbf16>, vector<8x128xbf16>, vector<16x128xf32> -> vector<16x128xf32>
    %15 = arith.addf %6, %14 : vector<16x128xf32>
    %16 = arith.truncf %9 : vector<16x8xf32> to vector<16x8xbf16>
    %cst_11 = arith.constant dense<0.000000e+00> : vector<16x8xf32>
    %17 = tpu.matmul %7, %16, %cst_11 {dimension_numbers = #tpu.dot_dimension_numbers<[1], [0], [0], [1], [0, 0, 1, 1], [], []>} : vector<16x16xbf16>, vector<16x8xbf16>, vector<16x8xf32> -> vector<16x8xf32>
    %cst_12 = arith.constant 2.000000e+00 : f32
    %18 = vector.broadcast %cst_12 : f32 to vector<16x8xf32>
    %19 = arith.mulf %18, %17 : vector<16x8xf32>
    %20 = arith.subf %19, %1 : vector<16x8xf32>
    %c2 = arith.constant 2 : index
    %c0_13 = arith.constant 0 : index
    %c0_14 = arith.constant 0 : index
    %21 = vector.load %arg4[%c2, %c0_13, %c0_14] : memref<5x8x128xf32, #tpu.memory_space<vmem>>, vector<1x8x128xf32>
    %22 = vector.shape_cast %21 : vector<1x8x128xf32> to vector<8x128xf32>
    %23 = arith.truncf %20 : vector<16x8xf32> to vector<16x8xbf16>
    %24 = arith.truncf %22 : vector<8x128xf32> to vector<8x128xbf16>
    %cst_15 = arith.constant dense<0.000000e+00> : vector<16x128xf32>
    %25 = tpu.matmul %23, %24, %cst_15 {dimension_numbers = #tpu.dot_dimension_numbers<[1], [0], [0], [1], [0, 0, 1, 1], [], []>} : vector<16x8xbf16>, vector<8x128xbf16>, vector<16x128xf32> -> vector<16x128xf32>
    %26 = arith.addf %15, %25 : vector<16x128xf32>
    %c0_16 = arith.constant 0 : index
    %c0_17 = arith.constant 0 : index
    %27 = vector.load %arg3[%c0_16, %c0_17] : memref<16x16xbf16, #tpu.memory_space<vmem>>, vector<16x16xbf16>
    %28 = arith.truncf %9 : vector<16x8xf32> to vector<16x8xbf16>
    %cst_18 = arith.constant dense<0.000000e+00> : vector<16x8xf32>
    %29 = tpu.matmul %27, %28, %cst_18 {dimension_numbers = #tpu.dot_dimension_numbers<[1], [0], [0], [1], [0, 0, 1, 1], [], []>} : vector<16x16xbf16>, vector<16x8xbf16>, vector<16x8xf32> -> vector<16x8xf32>
    %c3 = arith.constant 3 : index
    %c0_19 = arith.constant 0 : index
    %c0_20 = arith.constant 0 : index
    %30 = vector.load %arg4[%c3, %c0_19, %c0_20] : memref<5x8x128xf32, #tpu.memory_space<vmem>>, vector<1x8x128xf32>
    %31 = vector.shape_cast %30 : vector<1x8x128xf32> to vector<8x128xf32>
    %32 = arith.truncf %29 : vector<16x8xf32> to vector<16x8xbf16>
    %33 = arith.truncf %31 : vector<8x128xf32> to vector<8x128xbf16>
    %cst_21 = arith.constant dense<0.000000e+00> : vector<16x128xf32>
    %34 = tpu.matmul %32, %33, %cst_21 {dimension_numbers = #tpu.dot_dimension_numbers<[1], [0], [0], [1], [0, 0, 1, 1], [], []>} : vector<16x8xbf16>, vector<8x128xbf16>, vector<16x128xf32> -> vector<16x128xf32>
    %35 = arith.addf %26, %34 : vector<16x128xf32>
    %36 = arith.truncf %29 : vector<16x8xf32> to vector<16x8xbf16>
    %cst_22 = arith.constant dense<0.000000e+00> : vector<16x8xf32>
    %37 = tpu.matmul %27, %36, %cst_22 {dimension_numbers = #tpu.dot_dimension_numbers<[1], [0], [0], [1], [0, 0, 1, 1], [], []>} : vector<16x16xbf16>, vector<16x8xbf16>, vector<16x8xf32> -> vector<16x8xf32>
    %cst_23 = arith.constant 2.000000e+00 : f32
    %38 = vector.broadcast %cst_23 : f32 to vector<16x8xf32>
    %39 = arith.mulf %38, %37 : vector<16x8xf32>
    %40 = arith.subf %39, %9 : vector<16x8xf32>
    %c4 = arith.constant 4 : index
    %c0_24 = arith.constant 0 : index
    %c0_25 = arith.constant 0 : index
    %41 = vector.load %arg4[%c4, %c0_24, %c0_25] : memref<5x8x128xf32, #tpu.memory_space<vmem>>, vector<1x8x128xf32>
    %42 = vector.shape_cast %41 : vector<1x8x128xf32> to vector<8x128xf32>
    %43 = arith.truncf %40 : vector<16x8xf32> to vector<16x8xbf16>
    %44 = arith.truncf %42 : vector<8x128xf32> to vector<8x128xbf16>
    %cst_26 = arith.constant dense<0.000000e+00> : vector<16x128xf32>
    %45 = tpu.matmul %43, %44, %cst_26 {dimension_numbers = #tpu.dot_dimension_numbers<[1], [0], [0], [1], [0, 0, 1, 1], [], []>} : vector<16x8xbf16>, vector<8x128xbf16>, vector<16x128xf32> -> vector<16x128xf32>
    %46 = arith.addf %35, %45 : vector<16x128xf32>
    %c0_27 = arith.constant 0 : index
    %c0_28 = arith.constant 0 : index
    %47 = vector.load %arg5[%c0_27, %c0_28] : memref<1x128xf32, #tpu.memory_space<vmem>>, vector<1x128xf32>
    %48 = vector.broadcast %47 : vector<1x128xf32> to vector<16x128xf32>
    %49 = arith.addf %46, %48 : vector<16x128xf32>
    %cst_29 = arith.constant 0.000000e+00 : f32
    %50 = vector.broadcast %cst_29 : f32 to vector<16x128xf32>
    %51 = arith.maximumf %49, %50 : vector<16x128xf32>
    %c0_30 = arith.constant 0 : index
    %c0_31 = arith.constant 0 : index
    %c0_32 = arith.constant 0 : index
    %52 = vector.load %arg6[%c0_30, %c0_31, %c0_32] : memref<1x16x128xf32, #tpu.memory_space<vmem>>, vector<1x16x128xf32>
    %53 = vector.shape_cast %52 : vector<1x16x128xf32> to vector<16x128xf32>
    %54 = vector.shape_cast %51 : vector<16x128xf32> to vector<1x16x128xf32>
    tpu.vector_store %arg6[%c0_30, %c0_31, %c0_32], %54 {strides = array<i32>} : memref<1x16x128xf32, #tpu.memory_space<vmem>>, vector<1x16x128xf32>,
    return
  }
  func.func @transform_0(%arg0: i32) -> (i32, i32, i32) {
    %c0_i32 = arith.constant 0 : i32
    %c0_i32_0 = arith.constant 0 : i32
    %c0_i32_1 = arith.constant 0 : i32
    return %arg0, %c0_i32, %c0_i32_0 : i32, i32, i32
  }
  func.func @transform_1(%arg0: i32) -> (i32, i32) {
    %c0_i32 = arith.constant 0 : i32
    %c0_i32_0 = arith.constant 0 : i32
    %c0_i32_1 = arith.constant 0 : i32
    return %c0_i32, %c0_i32_0 : i32, i32
  }
  func.func @transform_2(%arg0: i32) -> (i32, i32) {
    %c0_i32 = arith.constant 0 : i32
    %c0_i32_0 = arith.constant 0 : i32
    %c0_i32_1 = arith.constant 0 : i32
    return %c0_i32, %c0_i32_0 : i32, i32
  }
  func.func @transform_3(%arg0: i32) -> (i32, i32, i32) {
    %c0_i32 = arith.constant 0 : i32
    %c0_i32_0 = arith.constant 0 : i32
    %c0_i32_1 = arith.constant 0 : i32
    %c0_i32_2 = arith.constant 0 : i32
    return %c0_i32, %c0_i32_0, %c0_i32_1 : i32, i32, i32
  }
  func.func @transform_4(%arg0: i32) -> (i32, i32) {
    %c0_i32 = arith.constant 0 : i32
    %c0_i32_0 = arith.constant 0 : i32
    %c0_i32_1 = arith.constant 0 : i32
    return %c0_i32, %c0_i32_0 : i32, i32
  }
  func.func @transform_5(%arg0: i32) -> (i32, i32, i32) {
    %c0_i32 = arith.constant 0 : i32
    %c0_i32_0 = arith.constant 0 : i32
    %c0_i32_1 = arith.constant 0 : i32
    return %arg0, %c0_i32, %c0_i32_0 : i32, i32, i32
  }
}

</mosaic_0001>

<llo_original>
// kernel: _d_gcn_forward_impl.1
$region0: #{_d_gcn_forward_impl.1}
  #allocation0 [shape = 'u32[]', space=smem, size = 0x4, offset = 0x4, fixed_abs, tag = 'smem constant byte address 0x4 - core index']
  #allocation1 [shape = 'u32[72,128]{1,0:T(1,128)}', space=vmem, size = 0x9000, scoped, tag = 'internal scratch']
  %s0 = inlined_call_operand.vmem [shape: f32[2,16,8], index: 0, kind: input, shape index: {}]
  %s1 = inlined_call_operand.vmem [shape: bf16[16,16], index: 1, kind: input, shape index: {}]
  %s2 = inlined_call_operand.vmem [shape: bf16[16,16], index: 2, kind: input, shape index: {}]
  %s3 = inlined_call_operand.vmem [shape: f32[5,8,128], index: 3, kind: input, shape index: {}]
  %s4 = inlined_call_operand.vmem [shape: f32[1,128], index: 4, kind: input, shape index: {}]
  %s5 = inlined_call_operand.hbm [shape: f32[2,16,128], index: 5, kind: output, shape index: {}]
  %s6 = sld [smem:[#allocation0]]
  $region53: #{_d_gcn_forward_impl.1} parent=0
    _
  %s8 = ssub.s32 1, %s6
  %s9 = scalar_select 0, %s8, %s6
  $region1: #{_d_gcn_forward_impl.1} parent=0
    #allocation2 [shape = 'u8[16384]{0}', space=vmem, size = 0x4000, scoped, tag = 'output window, operand 0']
    #allocation3 [shape = 's32[2]{0}', space=sflag, size = 0x8, scoped, tag = 'scoped memory for _d_gcn_forward_impl.1']
    %10 = vsyncpa [#allocation3], 0
    %s11 = scalar_lea.sflag [#allocation3], 1
    %12 = vsyncpa %s11, 0
    loop: start=0, step=1, limit=4
    $region2: #{_d_gcn_forward_impl.1} parent=1 // loop_pre_header
      _
    $region3: #{_d_gcn_forward_impl.1} parent=1 // loop_header
      %s14 = sphi 0, %s18
      %p15 = scmp.ge.s32.totalorder %s14, 4
      %s24 = sphi 0, %s26
      %s27 = sphi 0, %s24
      %s28 = sphi 0, %s27
      %s44 = sphi 0, %s28
      %s48 = sphi 0, %s48
      %s50 = sphi 0, %s48
      %s51 = sphi 0, %s50
      %s65 = sphi 0, %s51
      %s69 = sphi 0, %s69
      %s71 = sphi 0, %s69
      %s72 = sphi 0, %s71
      %s86 = sphi 0, %s72
      %s90 = sphi 0, %s90
      %s92 = sphi 0, %s90
      %s93 = sphi 0, %s92
      %s107 = sphi 0, %s93
      %s111 = sphi 0, %s111
      %s113 = sphi 0, %s111
      %s114 = sphi 0, %s113
      %s128 = sphi 0, %s114
      %s134 = sphi 0, %s136
      %s137 = sphi 0, %s134
      %s138 = sphi 0, %s137
      %s154 = sphi 0, %s138
    $region4: #{_d_gcn_forward_impl.1} parent=1 // loop_header_branch
      %17 = sbr.rel (%p15) target = $region8
    $region5: #{_d_gcn_forward_impl.1} parent=1 // loop_body
      %s19 = ssub.s32 %s14, 1
      %s20 = ssub.s32 %s14, 2
      %s21 = sadd.s32 %s14, 1
      %s22 = ssub.s32 %s14, %s21
      %p23 = scmp.eq.s32.totalorder %s22, 0
      %s25 = sadd.s32 %s24, 1
      %s26 = scalar_select %p23, %s24, %s25
      %p29 = pneg %p23
      %p30 = scmp.eq.s32.totalorder %s14, 1
      %p31 = por %p29, %p30
      %p32 = scmp.ne.s32.totalorder %s24, %s27
      %p33 = scmp.eq.s32.totalorder %s14, 0
      %p34 = por %p32, %p33
      %p35 = scmp.ne.s32.totalorder %s24, %s27
      %p36 = scmp.eq.s32.totalorder %s19, 1
      %p37 = por %p35, %p36
      %p38 = scmp.ne.s32.totalorder %s27, %s28
      %p39 = scmp.eq.s32.totalorder %s19, 0
      %p40 = por %p38, %p39
      %p41 = scmp.ne.s32.totalorder %s27, %s28
      %p42 = scmp.eq.s32.totalorder %s20, 1
      %p43 = por %p41, %p42
      %p45 = scmp.ne.s32.totalorder %s28, %s44
      %p46 = scmp.eq.s32.totalorder %s20, 0
      %p47 = por %p45, %p46
      %s49 = sadd.s32 %s48, 1
      %p52 = scmp.eq.s32.totalorder %s14, 1
      %p53 = scmp.ne.s32.totalorder %s48, %s50
      %p54 = scmp.eq.s32.totalorder %s14, 0
      %p55 = por %p53, %p54
      %p56 = scmp.ne.s32.totalorder %s48, %s50
      %p57 = scmp.eq.s32.totalorder %s19, 1
      %p58 = por %p56, %p57
      %p59 = scmp.ne.s32.totalorder %s50, %s51
      %p60 = scmp.eq.s32.totalorder %s19, 0
      %p61 = por %p59, %p60
      %p62 = scmp.ne.s32.totalorder %s50, %s51
      %p63 = scmp.eq.s32.totalorder %s20, 1
      %p64 = por %p62, %p63
      %p66 = scmp.ne.s32.totalorder %s51, %s65
      %p67 = scmp.eq.s32.totalorder %s20, 0
      %p68 = por %p66, %p67
      %s70 = sadd.s32 %s69, 1
      %p73 = scmp.eq.s32.totalorder %s14, 1
      %p74 = scmp.ne.s32.totalorder %s69, %s71
      %p75 = scmp.eq.s32.totalorder %s14, 0
      %p76 = por %p74, %p75
      %p77 = scmp.ne.s32.totalorder %s69, %s71
      %p78 = scmp.eq.s32.totalorder %s19, 1
      %p79 = por %p77, %p78
      %p80 = scmp.ne.s32.totalorder %s71, %s72
      %p81 = scmp.eq.s32.totalorder %s19, 0
      %p82 = por %p80, %p81
      %p83 = scmp.ne.s32.totalorder %s71, %s72
      %p84 = scmp.eq.s32.totalorder %s20, 1
      %p85 = por %p83, %p84
      %p87 = scmp.ne.s32.totalorder %s72, %s86
      %p88 = scmp.eq.s32.totalorder %s20, 0
      %p89 = por %p87, %p88
      %s91 = sadd.s32 %s90, 1
      %p94 = scmp.eq.s32.totalorder %s14, 1
      %p95 = scmp.ne.s32.totalorder %s90, %s92
      %p96 = scmp.eq.s32.totalorder %s14, 0
      %p97 = por %p95, %p96
      %p98 = scmp.ne.s32.totalorder %s90, %s92
      %p99 = scmp.eq.s32.totalorder %s19, 1
      %p100 = por %p98, %p99
      %p101 = scmp.ne.s32.totalorder %s92, %s93
      %p102 = scmp.eq.s32.totalorder %s19, 0
      %p103 = por %p101, %p102
      %p104 = scmp.ne.s32.totalorder %s92, %s93
      %p105 = scmp.eq.s32.totalorder %s20, 1
      %p106 = por %p104, %p105
      %p108 = scmp.ne.s32.totalorder %s93, %s107
      %p109 = scmp.eq.s32.totalorder %s20, 0
      %p110 = por %p108, %p109
      %s112 = sadd.s32 %s111, 1
      %p115 = scmp.eq.s32.totalorder %s14, 1
      %p116 = scmp.ne.s32.totalorder %s111, %s113
      %p117 = scmp.eq.s32.totalorder %s14, 0
      %p118 = por %p116, %p117
      %p119 = scmp.ne.s32.totalorder %s111, %s113
      %p120 = scmp.eq.s32.totalorder %s19, 1
      %p121 = por %p119, %p120
      %p122 = scmp.ne.s32.totalorder %s113, %s114
      %p123 = scmp.eq.s32.totalorder %s19, 0
      %p124 = por %p122, %p123
      %p125 = scmp.ne.s32.totalorder %s113, %s114
      %p126 = scmp.eq.s32.totalorder %s20, 1
      %p127 = por %p125, %p126
      %p129 = scmp.ne.s32.totalorder %s114, %s128
      %p130 = scmp.eq.s32.totalorder %s20, 0
      %p131 = por %p129, %p130
      %s132 = ssub.s32 %s14, %s21
      %p133 = scmp.eq.s32.totalorder %s132, 0
      %s135 = sadd.s32 %s134, 1
      %s136 = scalar_select %p133, %s134, %s135
      %p139 = pneg %p133
      %p140 = scmp.eq.s32.totalorder %s14, 1
      %p141 = por %p139, %p140
      %p142 = scmp.ne.s32.totalorder %s134, %s137
      %p143 = scmp.eq.s32.totalorder %s14, 0
      %p144 = por %p142, %p143
      %p145 = scmp.ne.s32.totalorder %s134, %s137
      %p146 = scmp.eq.s32.totalorder %s19, 1
      %p147 = por %p145, %p146
      %p148 = scmp.ne.s32.totalorder %s137, %s138
      %p149 = scmp.eq.s32.totalorder %s19, 0
      %p150 = por %p148, %p149
      %p151 = scmp.ne.s32.totalorder %s137, %s138
      %p152 = scmp.eq.s32.totalorder %s20, 1
      %p153 = por %p151, %p152
      %p155 = scmp.ne.s32.totalorder %s138, %s154
      %p156 = scmp.eq.s32.totalorder %s20, 0
      %p157 = por %p155, %p156
      %p158 = scmp.le.s32.totalorder 1, %s14
      %p159 = scmp.lt.s32.totalorder %s14, 3
      %p160 = pnand %p158, %p159
      %p161 = pneg %p160
      // Predicated region
      $region9: #{_d_gcn_forward_impl.1} parent=5 // pred_check
        _
      $region10: #{_d_gcn_forward_impl.1} parent=5 // pred_check_branch
        %163 = sbr.rel (%p160) target = $region12
      $region11: #{_d_gcn_forward_impl.1} parent=5 // pred_region
        %s164 = ssub.s32 %s14, 1
        // Predicated region
        $region13: #{_d_gcn_forward_impl.1} parent=11 // pred_check
          %p165 = pneg %p61
        $region14: #{_d_gcn_forward_impl.1} parent=11 // pred_check_branch
          %167 = sbr.rel (%p165) target = $region16
        $region15: #{_d_gcn_forward_impl.1} parent=11 // pred_region
          _
        $region16: #{_d_gcn_forward_impl.1} parent=11 // pred_fallthru
          _
        // Predicated region
        $region17: #{_d_gcn_forward_impl.1} parent=11 // pred_check
          %p168 = pneg %p82
        $region18: #{_d_gcn_forward_impl.1} parent=11 // pred_check_branch
          %170 = sbr.rel (%p168) target = $region20
        $region19: #{_d_gcn_forward_impl.1} parent=11 // pred_region
          _
        $region20: #{_d_gcn_forward_impl.1} parent=11 // pred_fallthru
          _
        // Predicated region
        $region21: #{_d_gcn_forward_impl.1} parent=11 // pred_check
          %p171 = pneg %p103
        $region22: #{_d_gcn_forward_impl.1} parent=11 // pred_check_branch
          %173 = sbr.rel (%p171) target = $region24
        $region23: #{_d_gcn_forward_impl.1} parent=11 // pred_region
          _
        $region24: #{_d_gcn_forward_impl.1} parent=11 // pred_fallthru
          _
        // Predicated region
        $region25: #{_d_gcn_forward_impl.1} parent=11 // pred_check
          %p174 = pneg %p124
        $region26: #{_d_gcn_forward_impl.1} parent=11 // pred_check_branch
          %176 = sbr.rel (%p174) target = $region28
        $region27: #{_d_gcn_forward_impl.1} parent=11 // pred_region
          _
        $region28: #{_d_gcn_forward_impl.1} parent=11 // pred_fallthru
          _
      $region12: #{_d_gcn_forward_impl.1} parent=5 // pred_fallthru
        _
      %p177 = scmp.lt.s32.totalorder %s14, 2
      // Predicated region
      $region29: #{_d_gcn_forward_impl.1} parent=5 // pred_check
        %p178 = pneg %p177
      $region30: #{_d_gcn_forward_impl.1} parent=5 // pred_check_branch
        %180 = sbr.rel (%p178) target = $region32
      $region31: #{_d_gcn_forward_impl.1} parent=5 // pred_region
        // Predicated region
        $region33: #{_d_gcn_forward_impl.1} parent=31 // pred_check
          %p181 = pneg %p34
        $region34: #{_d_gcn_forward_impl.1} parent=31 // pred_check_branch
          %183 = sbr.rel (%p181) target = $region36
        $region35: #{_d_gcn_forward_impl.1} parent=31 // pred_region
          %p184 = scmp.lt.s32.totalorder %s14, 1
          %s185 = scalar_select %p184, %s14, 1
          %s186 = smul.addr %s185, 2
          %s187 = smul.addr %s186, 8
          %s188 = scalar_lea.vmem %s0, %s187
        $region36: #{_d_gcn_forward_impl.1} parent=31 // pred_fallthru
          _
      $region32: #{_d_gcn_forward_impl.1} parent=5 // pred_fallthru
        _
      %p189 = scmp.le.s32.totalorder 1, %s14
      %p190 = scmp.lt.s32.totalorder %s14, 3
      %p191 = pnand %p189, %p190
      %p192 = pneg %p191
      // Predicated region
      $region37: #{_d_gcn_forward_impl.1} parent=5 // pred_check
        _
      $region38: #{_d_gcn_forward_impl.1} parent=5 // pred_check_branch
        %194 = sbr.rel (%p191) target = $region40
      $region39: #{_d_gcn_forward_impl.1} parent=5 // pred_region
        %s195 = ssub.s32 %s14, 1
        %p196 = scmp.lt.s32.totalorder %s19, 1
        %s197 = scalar_select %p196, %s19, 1
        %s198 = smul.addr %s197, 2
        %s199 = smul.addr %s198, 8
        %s200 = scalar_lea.vmem %s0, %s199
        %p201 = pneg %p40
        %p202 = pneg %p37
        %p203 = pneg %p61
        %p204 = pneg %p58
        %p205 = pneg %p82
        %p206 = pneg %p79
        %p207 = pneg %p103
        %p208 = pneg %p100
        %p209 = pneg %p124
        %p210 = pneg %p121
        %p211 = pneg %p150
        %p212 = pneg %p147
        %s213 = sand.u32 %s137, 1
        %s214 = scalar_lea.sflag [#allocation3], %s213
        %s215 = sand.u32 %s137, 1
        %s216 = smul.addr %s215, 16
        %s217 = scalar_lea.vmem [#allocation2], %s216
        %p218 = scmp.lt.s32.totalorder %s19, 1
        %s219 = scalar_select %p218, %s19, 1
        %s220 = smul.addr %s219, 2
        %s221 = smul.addr %s220, 8
        %s222 = scalar_lea.vmem %s0, %s221
        %v224 = vld [vmem:[%s222] sm:$0xff]
        %v225 = vld [vmem:[%s222 + $0x8] sm:$0xff]
        %v226 = vld [vmem:[%s3] sm:$0xff]
        %v227 = vpack.c.bf16 %v225, %v224
        %v228 = vpack.c.bf16 %v226, %v226
        %v229 = vld [vmem:[%s1] sm:$0xf]
        %v230 = vld [vmem:[%s1 + $0x4] sm:$0xf]
        %v233 = vunpack.c.l.b16 %v229
        %v234 = vunpack.c.l.b16 %v230
        %v235 = vpack.c.b16 %v234, %v233
        %vm236 = vcmask 130048
        %v238 = vsel %vm236, %v235, 0
        %240 = vmatpush.bf16.msra.mxu0 0
        %241 = vmatpush.bf16.msra.mxu0 0
        %242 = vmatpush.bf16.msra.mxu0 0
        %243 = vmatpush.bf16.msra.mxu0 0
        %244 = vmatpush.bf16.msra.mxu0 0
        %245 = vmatpush.bf16.msra.mxu0 0
        %246 = vmatpush.bf16.msra.mxu0 0
        %247 = vmatpush.bf16.msra.mxu0 %v227
        %248 = vmatmul.bf16.gmra.mxu0 %v238
        %v249 = vpop.f32.mrf.mxu0
        %v250 = vadd.f32 0.0, %v249
        %v251 = vpop.f32.mrf.mxu0
        %v252 = vadd.f32 0.0, %v251
        %253 = vdwg.mxu0
        %s254 = scalar_lea.vmem %s3, 8
        %v255 = vld [vmem:[%s254] sm:$0xff]
        %v256 = vpack.c.bf16 %v252, %v250
        %v257 = vpack.c.bf16 %v255, %v255
        %vm258 = vcmask 64512
        %v260 = vsel %vm258, %v256, 0
        %vm262 = vcmask 1043456
        %v264 = vsel %vm262, %v257, 0
        %266 = vmatpush.bf16.msra.mxu0 0
        %267 = vmatpush.bf16.msra.mxu0 0
        %268 = vmatpush.bf16.msra.mxu0 0
        %269 = vmatpush.bf16.msra.mxu0 0
        %270 = vmatpush.bf16.msra.mxu0 0
        %271 = vmatpush.bf16.msra.mxu0 0
        %272 = vmatpush.bf16.msra.mxu0 0
        %273 = vmatpush.bf16.msra.mxu0 %v264
        %274 = vmatmul.bf16.gmra.mxu0 %v260
        %v275 = vpop.f32.mrf.mxu0
        %v276 = vadd.f32 0.0, %v275
        %v277 = vpop.f32.mrf.mxu0
        %v278 = vadd.f32 0.0, %v277
        %279 = vdwg.mxu0
        %v281 = vsel %vm258, %v227, 0
        %v284 = vsel %vm262, %v228, 0
        %286 = vmatpush.bf16.msra.mxu0 0
        %287 = vmatpush.bf16.msra.mxu0 0
        %288 = vmatpush.bf16.msra.mxu0 0
        %289 = vmatpush.bf16.msra.mxu0 0
        %290 = vmatpush.bf16.msra.mxu0 0
        %291 = vmatpush.bf16.msra.mxu0 0
        %292 = vmatpush.bf16.msra.mxu0 0
        %293 = vmatpush.bf16.msra.mxu0 %v284
        %294 = vmatmul.bf16.gmra.mxu0 %v281
        %v295 = vpop.f32.mrf.mxu0
        %v296 = vadd.f32 %v276, %v295
        %v297 = vpop.f32.mrf.mxu0
        %v298 = vadd.f32 %v278, %v297
        %299 = vdwg.mxu0
        %300 = vmatpush.bf16.msra.mxu0 0
        %301 = vmatpush.bf16.msra.mxu0 0
        %302 = vmatpush.bf16.msra.mxu0 0
        %303 = vmatpush.bf16.msra.mxu0 0
        %304 = vmatpush.bf16.msra.mxu0 0
        %305 = vmatpush.bf16.msra.mxu0 0
        %306 = vmatpush.bf16.msra.mxu0 0
        %307 = vmatpush.bf16.msra.mxu0 %v256
        %308 = vmatmul.bf16.gmra.mxu0 %v238
        %v309 = vpop.f32.mrf.mxu0
        %v310 = vadd.f32 0.0, %v309
        %v311 = vpop.f32.mrf.mxu0
        %v312 = vadd.f32 0.0, %v311
        %313 = vdwg.mxu0
        %v314 = vmul.f32 %v310, 2.0
        %v315 = vmul.f32 %v312, 2.0
        %v316 = vsub.f32 %v314, %v224
        %v317 = vsub.f32 %v315, %v225
        %s318 = scalar_lea.vmem %s3, 16
        %v319 = vld [vmem:[%s318] sm:$0xff]
        %v320 = vpack.c.bf16 %v317, %v316
        %v321 = vpack.c.bf16 %v319, %v319
        %v323 = vsel %vm258, %v320, 0
        %v326 = vsel %vm262, %v321, 0
        %328 = vmatpush.bf16.msra.mxu0 0
        %329 = vmatpush.bf16.msra.mxu0 0
        %330 = vmatpush.bf16.msra.mxu0 0
        %331 = vmatpush.bf16.msra.mxu0 0
        %332 = vmatpush.bf16.msra.mxu0 0
        %333 = vmatpush.bf16.msra.mxu0 0
        %334 = vmatpush.bf16.msra.mxu0 0
        %335 = vmatpush.bf16.msra.mxu0 %v326
        %336 = vmatmul.bf16.gmra.mxu0 %v323
        %v337 = vpop.f32.mrf.mxu0
        %v338 = vadd.f32 0.0, %v337
        %v339 = vpop.f32.mrf.mxu0
        %v340 = vadd.f32 0.0, %v339
        %341 = vdwg.mxu0
        %v342 = vadd.f32 %v296, %v338
        %v343 = vadd.f32 %v298, %v340
        %v344 = vld [vmem:[%s2] sm:$0xf]
        %v345 = vld [vmem:[%s2 + $0x4] sm:$0xf]
        %v348 = vunpack.c.l.b16 %v344
        %v349 = vunpack.c.l.b16 %v345
        %v350 = vpack.c.b16 %v349, %v348
        %v352 = vsel %vm236, %v350, 0
        %354 = vmatpush.bf16.msra.mxu0 0
        %355 = vmatpush.bf16.msra.mxu0 0
        %356 = vmatpush.bf16.msra.mxu0 0
        %357 = vmatpush.bf16.msra.mxu0 0
        %358 = vmatpush.bf16.msra.mxu0 0
        %359 = vmatpush.bf16.msra.mxu0 0
        %360 = vmatpush.bf16.msra.mxu0 0
        %361 = vmatpush.bf16.msra.mxu0 %v256
        %362 = vmatmul.bf16.gmra.mxu0 %v352
        %v363 = vpop.f32.mrf.mxu0
        %v364 = vadd.f32 0.0, %v363
        %v365 = vpop.f32.mrf.mxu0
        %v366 = vadd.f32 0.0, %v365
        %367 = vdwg.mxu0
        %s368 = scalar_lea.vmem %s3, 24
        %v369 = vld [vmem:[%s368] sm:$0xff]
        %v370 = vpack.c.bf16 %v366, %v364
        %v371 = vpack.c.bf16 %v369, %v369
        %v373 = vsel %vm258, %v370, 0
        %v376 = vsel %vm262, %v371, 0
        %378 = vmatpush.bf16.msra.mxu0 0
        %379 = vmatpush.bf16.msra.mxu0 0
        %380 = vmatpush.bf16.msra.mxu0 0
        %381 = vmatpush.bf16.msra.mxu0 0
        %382 = vmatpush.bf16.msra.mxu0 0
        %383 = vmatpush.bf16.msra.mxu0 0
        %384 = vmatpush.bf16.msra.mxu0 0
        %385 = vmatpush.bf16.msra.mxu0 %v376
        %386 = vmatmul.bf16.gmra.mxu0 %v373
        %v387 = vpop.f32.mrf.mxu0
        %v388 = vadd.f32 0.0, %v387
        %v389 = vpop.f32.mrf.mxu0
        %v390 = vadd.f32 0.0, %v389
        %391 = vdwg.mxu0
        %v392 = vadd.f32 %v342, %v388
        %v393 = vadd.f32 %v343, %v390
        %394 = vmatpush.bf16.msra.mxu0 0
        %395 = vmatpush.bf16.msra.mxu0 0
        %396 = vmatpush.bf16.msra.mxu0 0
        %397 = vmatpush.bf16.msra.mxu0 0
        %398 = vmatpush.bf16.msra.mxu0 0
        %399 = vmatpush.bf16.msra.mxu0 0
        %400 = vmatpush.bf16.msra.mxu0 0
        %401 = vmatpush.bf16.msra.mxu0 %v370
        %402 = vmatmul.bf16.gmra.mxu0 %v352
        %v403 = vpop.f32.mrf.mxu0
        %v404 = vadd.f32 0.0, %v403
        %v405 = vpop.f32.mrf.mxu0
        %v406 = vadd.f32 0.0, %v405
        %407 = vdwg.mxu0
        %v408 = vmul.f32 %v404, 2.0
        %v409 = vmul.f32 %v406, 2.0
        %v410 = vsub.f32 %v408, %v250
        %v411 = vsub.f32 %v409, %v252
        %s412 = scalar_lea.vmem %s3, 32
        %v413 = vld [vmem:[%s412] sm:$0xff]
        %v414 = vpack.c.bf16 %v411, %v410
        %v415 = vpack.c.bf16 %v413, %v413
        %v417 = vsel %vm258, %v414, 0
        %v420 = vsel %vm262, %v415, 0
        %422 = vmatpush.bf16.msra.mxu0 0
        %423 = vmatpush.bf16.msra.mxu0 0
        %424 = vmatpush.bf16.msra.mxu0 0
        %425 = vmatpush.bf16.msra.mxu0 0
        %426 = vmatpush.bf16.msra.mxu0 0
        %427 = vmatpush.bf16.msra.mxu0 0
        %428 = vmatpush.bf16.msra.mxu0 0
        %429 = vmatpush.bf16.msra.mxu0 %v420
        %430 = vmatmul.bf16.gmra.mxu0 %v417
        %v431 = vpop.f32.mrf.mxu0
        %v432 = vadd.f32 0.0, %v431
        %v433 = vpop.f32.mrf.mxu0
        %v434 = vadd.f32 0.0, %v433
        %435 = vdwg.mxu0
        %v436 = vadd.f32 %v392, %v432
        %v437 = vadd.f32 %v393, %v434
        %v438 = vld [vmem:[%s4] sm:$0x1]
        %v440 = vperm.slane %v438, 0
        %v442 = vadd.f32 %v436, %v440
        %v443 = vadd.f32 %v437, %v440
        %v444 = vmax.f32 %v442, 0.0
        %v445 = vmax.f32 %v443, 0.0
        %446 = vst [vmem:[%s217] sm:$0xff] %v444
        %447 = vst [vmem:[%s217 + $0x8] sm:$0xff] %v445
        %s448 = sand.u32 %s137, 1
        %s449 = scalar_lea.sflag [#allocation3], %s448
        %s450 = sand.u32 %s137, 1
        %s451 = smul.addr %s450, 16
        %s452 = scalar_lea.vmem [#allocation2], %s451
        // Predicated region
        $region41: #{_d_gcn_forward_impl.1} parent=39 // pred_check
          %p453 = pneg %p147
        $region42: #{_d_gcn_forward_impl.1} parent=39 // pred_check_branch
          %455 = sbr.rel (%p453) target = $region44
        $region43: #{_d_gcn_forward_impl.1} parent=39 // pred_region
          %457 = vsyncadd %s449, 0
          %s458 = smul.addr %s19, 2
          %s459 = smul.addr %s458, 8
          %s460 = scalar_lea.hbm %s5, %s459
          %s461 = sshll.u32 %s452, 4
          %s462 = int_to_ptr.vmem [resolvable:$true] %s461
          %s463 = sshll.u32 %s460, 4
          %s464 = int_to_ptr.hbm [resolvable:$true] %s463
          %469 = dma.vmem_to_hbm [thread:$0]  %s462, 256, %s464, %s449, 128, 128, 8
        $region44: #{_d_gcn_forward_impl.1} parent=39 // pred_fallthru
          _
      $region40: #{_d_gcn_forward_impl.1} parent=5 // pred_fallthru
        _
      %p470 = scmp.le.s32.totalorder 2, %s14
      // Predicated region
      $region45: #{_d_gcn_forward_impl.1} parent=5 // pred_check
        %p471 = pneg %p470
      $region46: #{_d_gcn_forward_impl.1} parent=5 // pred_check_branch
        %473 = sbr.rel (%p471) target = $region48
      $region47: #{_d_gcn_forward_impl.1} parent=5 // pred_region
        %s474 = ssub.s32 %s14, 2
        // Predicated region
        $region49: #{_d_gcn_forward_impl.1} parent=47 // pred_check
          %p475 = pneg %p153
        $region50: #{_d_gcn_forward_impl.1} parent=47 // pred_check_branch
          %477 = sbr.rel (%p475) target = $region52
        $region51: #{_d_gcn_forward_impl.1} parent=47 // pred_region
          %s478 = sand.u32 %s138, 1
          %s479 = scalar_lea.sflag [#allocation3], %s478
          %s480 = sand.u32 %s138, 1
          %s481 = smul.addr %s480, 16
          %s482 = scalar_lea.vmem [#allocation2], %s481
          %484 = dma.done %s479, 256
        $region52: #{_d_gcn_forward_impl.1} parent=47 // pred_fallthru
          _
      $region48: #{_d_gcn_forward_impl.1} parent=5 // pred_fallthru
        _
    $region6: #{_d_gcn_forward_impl.1} parent=1 // loop_footer
      %s18 = sadd.s32 1, %s14
    $region7: #{_d_gcn_forward_impl.1} parent=1 // loop_footer_branch
      %13 = sbr.rel target = $region3
    $region8: #{_d_gcn_forward_impl.1} parent=1 // loop_exit
      _
    %485 = vsyncpa [#allocation3], 1
    %s486 = scalar_lea.sflag [#allocation3], 1
    %487 = vsyncpa %s486, 1

</llo_original>
